<compile_context>
chip_gen: v7x
topology: tpu7x:2x2x1
jax: 0.10.0
libtpu: 0.0.40
codegen_flags: <defaults>
</compile_context>

<pallas_src>
import functools

import jax
import jax.numpy as jnp
from jax import lax
from jax.experimental import pallas as pl
from jax.experimental.pallas import tpu as pltpu


def _pick_channel_tile(num_channels, hw, itemsize):
    """Channel tile: whole C if it fits the budget, else a multiple of 8 dividing C.

    Each input block is kept <= ~4 MiB so the double-buffered input stream
    (2 blocks) stays far inside the 32 MiB scoped-VMEM default while the
    blocks remain large enough to run near the HBM roofline.
    """
    budget_bytes = 4 * 1024 * 1024
    max_tc = max(1, budget_bytes // (hw * itemsize))
    if num_channels <= max_tc:
        return num_channels
    tc = min(num_channels, (max_tc // 8) * 8)
    while tc >= 8:
        if num_channels % tc == 0:
            return tc
        tc -= 8
    # Fall back to the full channel dim (always correct; blocks just grow).
    return num_channels


def _spatial_attention_kernel(x_ref, masks_ref, w_ref, o_ref, sum_ref, max_ref,
                              *, channels, height, width):
    c_idx = pl.program_id(1)
    hw = height * width

    # (TC, H*W) lane-dense block; cast once (bf16 inputs stay bf16 on the wire).
    x = x_ref[...].astype(jnp.float32)
    part_sum = jnp.sum(x, axis=0, keepdims=True)      # (1, H*W)
    part_max = jnp.max(x, axis=0, keepdims=True)      # (1, H*W)

    # First channel step writes the partials directly (no zero/-inf init
    # pass); later steps accumulate into the VMEM scratch.
    @pl.when(c_idx == 0)
    def _init():
        sum_ref[...] = part_sum
        max_ref[...] = part_max

    @pl.when(c_idx > 0)
    def _accumulate():
        sum_ref[...] += part_sum
        max_ref[...] = jnp.maximum(max_ref[...], part_max)

    @pl.when(c_idx == pl.num_programs(1) - 1)
    def _finalize():
        avg_plane = sum_ref[...] * (1.0 / channels)   # channel 0 of the concat
        max_plane = max_ref[...]                      # channel 1 of the concat

        def shift(v, off):
            # result[k] = v[(k + off) mod hw]; wrapped lanes are zeroed by the
            # border masks below, reproducing Conv2d's zero padding.
            if off == 0:
                return v
            return pltpu.roll(v, (-off) % hw, axis=1)

        # Zero-padding border masks, precomputed once in the wrapper:
        #   row 0: col >= 1, row 1: col <= W-2, row 2: row >= 1, row 3: row <= H-2
        col_mask = (masks_ref[0:1, :], None, masks_ref[1:2, :])
        row_mask = (masks_ref[2:3, :], None, masks_ref[3:4, :])

        # Hoist all 18 conv weights (flat f32[18] in SMEM) out of the loops.
        w = [[[w_ref[c * 9 + ki * 3 + kj] for kj in range(3)]
              for ki in range(3)] for c in range(2)]

        # Horizontal taps: 4 lane rolls total (dx = -1/+1 per input plane),
        # shared by all three kernel rows; column masks enforce zero padding
        # along W.
        planes = (avg_plane, max_plane)
        taps = [[None] * 3 for _ in range(2)]
        for c in range(2):
            for kj in range(3):
                t = shift(planes[c], kj - 1)
                if col_mask[kj] is not None:
                    t = t * col_mask[kj]
                taps[c][kj] = t

        # Combine the 6 weighted taps per kernel row, then one vertical roll
        # (offset +/- W on the flat layout) + row mask per kernel row.
        conv = jnp.zeros_like(avg_plane)
        for ki in range(3):
            r = jnp.zeros_like(avg_plane)
            for c in range(2):
                for kj in range(3):
                    r = r + w[c][ki][kj] * taps[c][kj]
            r = shift(r, (ki - 1) * width)
            if row_mask[ki] is not None:
                r = r * row_mask[ki]
            conv = conv + r

        y = conv * jax.nn.sigmoid(conv)               # x * sigmoid(x), EUP path
        o_ref[...] = y.astype(o_ref.dtype)


def spatial_attention(x, weight):
    """x: (N, C, H, W); weight: (2, 3, 3) -> returns (N, 1, H, W)."""
    N, C, H, W = x.shape
    HW = H * W

    # Lane-dense views: spatial dims flattened onto the lane axis.
    x_flat = x.reshape(N, C, HW)
    w_flat = weight.astype(jnp.float32).reshape(-1)   # f32[18], contiguous SMEM

    # Zero-padding border masks for the flat-layout conv (computed once here
    # instead of per grid step; avoids in-kernel integer div/mod).
    idx = jnp.arange(HW, dtype=jnp.int32)
    col = idx % W
    row = idx // W
    border_masks = jnp.stack(
        [col >= 1, col <= W - 2, row >= 1, row <= H - 2]).astype(jnp.float32)

    tc = _pick_channel_tile(C, HW, x.dtype.itemsize)
    n_ct = C // tc

    kernel = functools.partial(
        _spatial_attention_kernel, channels=C, height=H, width=W)

    out_flat = pl.pallas_call(
        kernel,
        out_shape=jax.ShapeDtypeStruct((N, 1, HW), x.dtype),
        grid_spec=pltpu.PrefetchScalarGridSpec(
            num_scalar_prefetch=0,
            # Batch axis is "parallel" (megacore); the channel-reduction axis
            # is last and "arbitrary" (accumulators live across it).
            grid=(N, n_ct),
            in_specs=[
                pl.BlockSpec((pl.Squeezed(), tc, HW), lambda n, c: (n, c, 0)),
                pl.BlockSpec((4, HW), lambda n, c: (0, 0)),
                pl.BlockSpec(memory_space=pltpu.MemorySpace.SMEM),
            ],
            out_specs=pl.BlockSpec((pl.Squeezed(), 1, HW),
                                   lambda n, c: (n, 0, 0)),
            scratch_shapes=[
                pltpu.VMEM((1, HW), jnp.float32),   # running channel sum
                pltpu.VMEM((1, HW), jnp.float32),   # running channel max
            ],
        ),
        compiler_params=pltpu.CompilerParams(
            dimension_semantics=("parallel", "arbitrary"),
            vmem_limit_bytes=32 * 1024 * 1024,
        ),
    )(x_flat, border_masks, w_flat)

    return out_flat.reshape(N, 1, H, W)


def reference(x, weight):
    avg_out = jnp.mean(x, axis=1, keepdims=True)
    max_out = jnp.max(x, axis=1, keepdims=True)
    cat = jnp.concatenate([avg_out, max_out], axis=1)
    y = lax.conv_general_dilated(
        cat.astype(jnp.float32), weight[None].astype(jnp.float32),
        window_strides=(1, 1), padding="SAME",
        dimension_numbers=("NCHW", "OIHW", "NCHW"))
    return y * jax.nn.sigmoid(y)


if __name__ == "__main__":
    N, C, H, W = 2, 4, 16, 16

    key = jax.random.PRNGKey(0)
    kx, kw = jax.random.split(key)
    x = jax.random.normal(kx, (N, C, H, W), dtype=jnp.float32)
    # Conv2d(2, 1, 3, padding=1, bias=False) weight kept as (in=2, 3, 3);
    # deterministic synthetic init (kaiming-ish scale).
    weight = jax.random.uniform(kw, (2, 3, 3), jnp.float32,
                                minval=-0.2357, maxval=0.2357)

    out = spatial_attention(x, weight)
    out = jax.block_until_ready(out)

    exp = reference(x, weight)
    assert out.shape == (N, 1, H, W), out.shape
    assert jnp.allclose(out, exp, atol=1e-5, rtol=1e-5), \
        float(jnp.max(jnp.abs(out - exp)))

    print("KERNEL_OK")
</pallas_src>

<mosaic_0001>
module attributes {stable_mosaic.version = 11 : i64} {
  func.func @_spatial_attention_kernel(%arg0: i32, %arg1: i32, %arg2: memref<1x4x256xf32, #tpu.memory_space<vmem>>, %arg3: memref<4x256xf32, #tpu.memory_space<vmem>>, %arg4: memref<18xf32, #tpu.memory_space<smem>>, %arg5: memref<1x1x256xf32, #tpu.memory_space<vmem>>, %arg6: memref<1x256xf32, #tpu.memory_space<vmem>>, %arg7: memref<1x256xf32, #tpu.memory_space<vmem>>) attributes {dimension_semantics = [#tpu.dimension_semantics<parallel>, #tpu.dimension_semantics<arbitrary>], iteration_bounds = array<i64: 2, 1>, scalar_prefetch = 0 : i64, scratch_operands = 2 : i64, tpu.core_type = #tpu.core_type<tc>, window_params = [{transform_indices = @transform_0, window_bounds = array<i64: 1, 4, 256>}, {pipeline_mode = #tpu.pipeline_mode<synchronous>, transform_indices = @transform_1, window_bounds = array<i64: 4, 256>}, {transform_indices = @transform_2, window_bounds = array<i64: 18>}, {transform_indices = @transform_3, window_bounds = array<i64: 1, 1, 256>}]} {
    %c0 = arith.constant 0 : index
    %c0_0 = arith.constant 0 : index
    %c0_1 = arith.constant 0 : index
    %0 = vector.load %arg2[%c0, %c0_0, %c0_1] : memref<1x4x256xf32, #tpu.memory_space<vmem>>, vector<1x4x256xf32>
    %1 = vector.shape_cast %0 : vector<1x4x256xf32> to vector<4x256xf32>
    %cst = arith.constant dense<0.000000e+00> : vector<256xf32>
    %2 = vector.multi_reduction <add>, %1, %cst [0] : vector<4x256xf32> to vector<256xf32>
    %3 = vector.shape_cast %2 : vector<256xf32> to vector<1x256xf32>
    %cst_2 = arith.constant dense<0xFF800000> : vector<256xf32>
    %4 = vector.multi_reduction <maximumf>, %1, %cst_2 [0] : vector<4x256xf32> to vector<256xf32>
    %5 = vector.shape_cast %4 : vector<256xf32> to vector<1x256xf32>
    %c0_i32 = arith.constant 0 : i32
    %6 = arith.cmpi eq, %arg1, %c0_i32 : i32
    %7 = arith.extui %6 : i1 to i32
    %c0_i32_3 = arith.constant 0 : i32
    %8 = arith.cmpi ne, %7, %c0_i32_3 : i32
    scf.if %8 {
      %c0_8 = arith.constant 0 : index
      %c0_9 = arith.constant 0 : index
      %15 = vector.load %arg6[%c0_8, %c0_9] : memref<1x256xf32, #tpu.memory_space<vmem>>, vector<1x256xf32>
      tpu.vector_store %arg6[%c0_8, %c0_9], %3 {strides = array<i32>} : memref<1x256xf32, #tpu.memory_space<vmem>>, vector<1x256xf32>,
      %c0_10 = arith.constant 0 : index
      %c0_11 = arith.constant 0 : index
      %16 = vector.load %arg7[%c0_10, %c0_11] : memref<1x256xf32, #tpu.memory_space<vmem>>, vector<1x256xf32>
      tpu.vector_store %arg7[%c0_10, %c0_11], %5 {strides = array<i32>} : memref<1x256xf32, #tpu.memory_space<vmem>>, vector<1x256xf32>,
    } else {
    }
    %c0_i32_4 = arith.constant 0 : i32
    %9 = arith.cmpi sgt, %arg1, %c0_i32_4 : i32
    %10 = arith.extui %9 : i1 to i32
    %c0_i32_5 = arith.constant 0 : i32
    %11 = arith.cmpi ne, %10, %c0_i32_5 : i32
    scf.if %11 {
      %c0_8 = arith.constant 0 : index
      %c0_9 = arith.constant 0 : index
      %15 = vector.load %arg6[%c0_8, %c0_9] : memref<1x256xf32, #tpu.memory_space<vmem>>, vector<1x256xf32>
      %16 = arith.addf %15, %3 : vector<1x256xf32>
      %c0_10 = arith.constant 0 : index
      %c0_11 = arith.constant 0 : index
      %17 = vector.load %arg6[%c0_10, %c0_11] : memref<1x256xf32, #tpu.memory_space<vmem>>, vector<1x256xf32>
      tpu.vector_store %arg6[%c0_10, %c0_11], %16 {strides = array<i32>} : memref<1x256xf32, #tpu.memory_space<vmem>>, vector<1x256xf32>,
      %c0_12 = arith.constant 0 : index
      %c0_13 = arith.constant 0 : index
      %18 = vector.load %arg7[%c0_12, %c0_13] : memref<1x256xf32, #tpu.memory_space<vmem>>, vector<1x256xf32>
      %19 = arith.maximumf %18, %5 : vector<1x256xf32>
      %c0_14 = arith.constant 0 : index
      %c0_15 = arith.constant 0 : index
      %20 = vector.load %arg7[%c0_14, %c0_15] : memref<1x256xf32, #tpu.memory_space<vmem>>, vector<1x256xf32>
      tpu.vector_store %arg7[%c0_14, %c0_15], %19 {strides = array<i32>} : memref<1x256xf32, #tpu.memory_space<vmem>>, vector<1x256xf32>,
    } else {
    }
    %c0_i32_6 = arith.constant 0 : i32
    %12 = arith.cmpi eq, %arg1, %c0_i32_6 : i32
    %13 = arith.extui %12 : i1 to i32
    %c0_i32_7 = arith.constant 0 : i32
    %14 = arith.cmpi ne, %13, %c0_i32_7 : i32
    scf.if %14 {
      %c0_8 = arith.constant 0 : index
      %c0_9 = arith.constant 0 : index
      %15 = vector.load %arg6[%c0_8, %c0_9] : memref<1x256xf32, #tpu.memory_space<vmem>>, vector<1x256xf32>
      %cst_10 = arith.constant 2.500000e-01 : f32
      %16 = vector.broadcast %cst_10 : f32 to vector<1x256xf32>
      %17 = arith.mulf %15, %16 : vector<1x256xf32>
      %c0_11 = arith.constant 0 : index
      %c0_12 = arith.constant 0 : index
      %18 = vector.load %arg7[%c0_11, %c0_12] : memref<1x256xf32, #tpu.memory_space<vmem>>, vector<1x256xf32>
      %c0_13 = arith.constant 0 : index
      %c0_14 = arith.constant 0 : index
      %19 = vector.load %arg3[%c0_13, %c0_14] : memref<4x256xf32, #tpu.memory_space<vmem>>, vector<1x256xf32>
      %c1 = arith.constant 1 : index
      %c0_15 = arith.constant 0 : index
      %20 = vector.load %arg3[%c1, %c0_15] : memref<4x256xf32, #tpu.memory_space<vmem>>, vector<1x256xf32>
      %c2 = arith.constant 2 : index
      %c0_16 = arith.constant 0 : index
      %21 = vector.load %arg3[%c2, %c0_16] : memref<4x256xf32, #tpu.memory_space<vmem>>, vector<1x256xf32>
      %c3 = arith.constant 3 : index
      %c0_17 = arith.constant 0 : index
      %22 = vector.load %arg3[%c3, %c0_17] : memref<4x256xf32, #tpu.memory_space<vmem>>, vector<1x256xf32>
      %c0_18 = arith.constant 0 : index
      %23 = memref.load %arg4[%c0_18] : memref<18xf32, #tpu.memory_space<smem>>
      %c1_19 = arith.constant 1 : index
      %24 = memref.load %arg4[%c1_19] : memref<18xf32, #tpu.memory_space<smem>>
      %c2_20 = arith.constant 2 : index
      %25 = memref.load %arg4[%c2_20] : memref<18xf32, #tpu.memory_space<smem>>
      %c3_21 = arith.constant 3 : index
      %26 = memref.load %arg4[%c3_21] : memref<18xf32, #tpu.memory_space<smem>>
      %c4 = arith.constant 4 : index
      %27 = memref.load %arg4[%c4] : memref<18xf32, #tpu.memory_space<smem>>
      %c5 = arith.constant 5 : index
      %28 = memref.load %arg4[%c5] : memref<18xf32, #tpu.memory_space<smem>>
      %c6 = arith.constant 6 : index
      %29 = memref.load %arg4[%c6] : memref<18xf32, #tpu.memory_space<smem>>
      %c7 = arith.constant 7 : index
      %30 = memref.load %arg4[%c7] : memref<18xf32, #tpu.memory_space<smem>>
      %c8 = arith.constant 8 : index
      %31 = memref.load %arg4[%c8] : memref<18xf32, #tpu.memory_space<smem>>
      %c9 = arith.constant 9 : index
      %32 = memref.load %arg4[%c9] : memref<18xf32, #tpu.memory_space<smem>>
      %c10 = arith.constant 10 : index
      %33 = memref.load %arg4[%c10] : memref<18xf32, #tpu.memory_space<smem>>
      %c11 = arith.constant 11 : index
      %34 = memref.load %arg4[%c11] : memref<18xf32, #tpu.memory_space<smem>>
      %c12 = arith.constant 12 : index
      %35 = memref.load %arg4[%c12] : memref<18xf32, #tpu.memory_space<smem>>
      %c13 = arith.constant 13 : index
      %36 = memref.load %arg4[%c13] : memref<18xf32, #tpu.memory_space<smem>>
      %c14 = arith.constant 14 : index
      %37 = memref.load %arg4[%c14] : memref<18xf32, #tpu.memory_space<smem>>
      %c15 = arith.constant 15 : index
      %38 = memref.load %arg4[%c15] : memref<18xf32, #tpu.memory_space<smem>>
      %c16 = arith.constant 16 : index
      %39 = memref.load %arg4[%c16] : memref<18xf32, #tpu.memory_space<smem>>
      %c17 = arith.constant 17 : index
      %40 = memref.load %arg4[%c17] : memref<18xf32, #tpu.memory_space<smem>>
      %c1_i32 = arith.constant 1 : i32
      %41 = tpu.dynamic_rotate %17 by %c1_i32 dim 1 : vector<1x256xf32>, i32 -> vector<1x256xf32>
      %42 = arith.mulf %41, %19 : vector<1x256xf32>
      %c255_i32 = arith.constant 255 : i32
      %43 = tpu.dynamic_rotate %17 by %c255_i32 dim 1 : vector<1x256xf32>, i32 -> vector<1x256xf32>
      %44 = arith.mulf %43, %20 : vector<1x256xf32>
      %c1_i32_22 = arith.constant 1 : i32
      %45 = tpu.dynamic_rotate %18 by %c1_i32_22 dim 1 : vector<1x256xf32>, i32 -> vector<1x256xf32>
      %46 = arith.mulf %45, %19 : vector<1x256xf32>
      %c255_i32_23 = arith.constant 255 : i32
      %47 = tpu.dynamic_rotate %18 by %c255_i32_23 dim 1 : vector<1x256xf32>, i32 -> vector<1x256xf32>
      %48 = arith.mulf %47, %20 : vector<1x256xf32>
      %cst_24 = arith.constant 0.000000e+00 : f32
      %49 = vector.broadcast %cst_24 : f32 to vector<1x256xf32>
      %cst_25 = arith.constant 0.000000e+00 : f32
      %50 = vector.broadcast %cst_25 : f32 to vector<1x256xf32>
      %51 = vector.broadcast %23 : f32 to vector<1x256xf32>
      %52 = arith.mulf %51, %42 : vector<1x256xf32>
      %53 = arith.addf %50, %52 : vector<1x256xf32>
      %54 = vector.broadcast %24 : f32 to vector<1x256xf32>
      %55 = arith.mulf %54, %17 : vector<1x256xf32>
      %56 = arith.addf %53, %55 : vector<1x256xf32>
      %57 = vector.broadcast %25 : f32 to vector<1x256xf32>
      %58 = arith.mulf %57, %44 : vector<1x256xf32>
      %59 = arith.addf %56, %58 : vector<1x256xf32>
      %60 = vector.broadcast %32 : f32 to vector<1x256xf32>
      %61 = arith.mulf %60, %46 : vector<1x256xf32>
      %62 = arith.addf %59, %61 : vector<1x256xf32>
      %63 = vector.broadcast %33 : f32 to vector<1x256xf32>
      %64 = arith.mulf %63, %18 : vector<1x256xf32>
      %65 = arith.addf %62, %64 : vector<1x256xf32>
      %66 = vector.broadcast %34 : f32 to vector<1x256xf32>
      %67 = arith.mulf %66, %48 : vector<1x256xf32>
      %68 = arith.addf %65, %67 : vector<1x256xf32>
      %c16_i32 = arith.constant 16 : i32
      %69 = tpu.dynamic_rotate %68 by %c16_i32 dim 1 : vector<1x256xf32>, i32 -> vector<1x256xf32>
      %70 = arith.mulf %69, %21 : vector<1x256xf32>
      %71 = arith.addf %49, %70 : vector<1x256xf32>
      %cst_26 = arith.constant 0.000000e+00 : f32
      %72 = vector.broadcast %cst_26 : f32 to vector<1x256xf32>
      %73 = vector.broadcast %26 : f32 to vector<1x256xf32>
      %74 = arith.mulf %73, %42 : vector<1x256xf32>
      %75 = arith.addf %72, %74 : vector<1x256xf32>
      %76 = vector.broadcast %27 : f32 to vector<1x256xf32>
      %77 = arith.mulf %76, %17 : vector<1x256xf32>
      %78 = arith.addf %75, %77 : vector<1x256xf32>
      %79 = vector.broadcast %28 : f32 to vector<1x256xf32>
      %80 = arith.mulf %79, %44 : vector<1x256xf32>
      %81 = arith.addf %78, %80 : vector<1x256xf32>
      %82 = vector.broadcast %35 : f32 to vector<1x256xf32>
      %83 = arith.mulf %82, %46 : vector<1x256xf32>
      %84 = arith.addf %81, %83 : vector<1x256xf32>
      %85 = vector.broadcast %36 : f32 to vector<1x256xf32>
      %86 = arith.mulf %85, %18 : vector<1x256xf32>
      %87 = arith.addf %84, %86 : vector<1x256xf32>
      %88 = vector.broadcast %37 : f32 to vector<1x256xf32>
      %89 = arith.mulf %88, %48 : vector<1x256xf32>
      %90 = arith.addf %87, %89 : vector<1x256xf32>
      %91 = arith.addf %71, %90 : vector<1x256xf32>
      %cst_27 = arith.constant 0.000000e+00 : f32
      %92 = vector.broadcast %cst_27 : f32 to vector<1x256xf32>
      %93 = vector.broadcast %29 : f32 to vector<1x256xf32>
      %94 = arith.mulf %93, %42 : vector<1x256xf32>
      %95 = arith.addf %92, %94 : vector<1x256xf32>
      %96 = vector.broadcast %30 : f32 to vector<1x256xf32>
      %97 = arith.mulf %96, %17 : vector<1x256xf32>
      %98 = arith.addf %95, %97 : vector<1x256xf32>
      %99 = vector.broadcast %31 : f32 to vector<1x256xf32>
      %100 = arith.mulf %99, %44 : vector<1x256xf32>
      %101 = arith.addf %98, %100 : vector<1x256xf32>
      %102 = vector.broadcast %38 : f32 to vector<1x256xf32>
      %103 = arith.mulf %102, %46 : vector<1x256xf32>
      %104 = arith.addf %101, %103 : vector<1x256xf32>
      %105 = vector.broadcast %39 : f32 to vector<1x256xf32>
      %106 = arith.mulf %105, %18 : vector<1x256xf32>
      %107 = arith.addf %104, %106 : vector<1x256xf32>
      %108 = vector.broadcast %40 : f32 to vector<1x256xf32>
      %109 = arith.mulf %108, %48 : vector<1x256xf32>
      %110 = arith.addf %107, %109 : vector<1x256xf32>
      %c240_i32 = arith.constant 240 : i32
      %111 = tpu.dynamic_rotate %110 by %c240_i32 dim 1 : vector<1x256xf32>, i32 -> vector<1x256xf32>
      %112 = arith.mulf %111, %22 : vector<1x256xf32>
      %113 = arith.addf %91, %112 : vector<1x256xf32>
      %114 = arith.negf %113 : vector<1x256xf32>
      %115 = math.exp %114 : vector<1x256xf32>
      %cst_28 = arith.constant 1.000000e+00 : f32
      %116 = vector.broadcast %cst_28 : f32 to vector<1x256xf32>
      %117 = arith.addf %116, %115 : vector<1x256xf32>
      %118 = arith.divf %116, %117 : vector<1x256xf32>
      %119 = arith.mulf %113, %118 : vector<1x256xf32>
      %c0_29 = arith.constant 0 : index
      %c0_30 = arith.constant 0 : index
      %c0_31 = arith.constant 0 : index
      %120 = vector.load %arg5[%c0_29, %c0_30, %c0_31] : memref<1x1x256xf32, #tpu.memory_space<vmem>>, vector<1x1x256xf32>
      %121 = vector.shape_cast %120 : vector<1x1x256xf32> to vector<1x256xf32>
      %122 = vector.shape_cast %119 : vector<1x256xf32> to vector<1x1x256xf32>
      tpu.vector_store %arg5[%c0_29, %c0_30, %c0_31], %122 {strides = array<i32>} : memref<1x1x256xf32, #tpu.memory_space<vmem>>, vector<1x1x256xf32>,
    } else {
    }
    return
  }
  func.func @transform_0(%arg0: i32, %arg1: i32) -> (i32, i32, i32) {
    %c0_i32 = arith.constant 0 : i32
    %c0_i32_0 = arith.constant 0 : i32
    return %arg0, %arg1, %c0_i32 : i32, i32, i32
  }
  func.func @transform_1(%arg0: i32, %arg1: i32) -> (i32, i32) {
    %c0_i32 = arith.constant 0 : i32
    %c0_i32_0 = arith.constant 0 : i32
    %c0_i32_1 = arith.constant 0 : i32
    return %c0_i32, %c0_i32_0 : i32, i32
  }
  func.func @transform_2(%arg0: i32, %arg1: i32) -> i32 {
    %c0_i32 = arith.constant 0 : i32
    %c0_i32_0 = arith.constant 0 : i32
    return %c0_i32 : i32
  }
  func.func @transform_3(%arg0: i32, %arg1: i32) -> (i32, i32, i32) {
    %c0_i32 = arith.constant 0 : i32
    %c0_i32_0 = arith.constant 0 : i32
    %c0_i32_1 = arith.constant 0 : i32
    return %arg0, %c0_i32, %c0_i32_0 : i32, i32, i32
  }
}

</mosaic_0001>

<llo_original>
// kernel: tpu_custom_call.1
$region0: #{tpu_custom_call.1}
  #allocation0 [shape = 'u32[]', space=smem, size = 0x4, offset = 0x4, fixed_abs, tag = 'smem constant byte address 0x4 - core index']
  #allocation1 [shape = 'u32[144,128]{1,0:T(1,128)}', space=vmem, size = 0x12000, scoped, tag = 'internal scratch']
  #allocation2 [shape = 'f32[1,256]{1,0:T(1,128)}', space=vmem, size = 0x400, scoped, tag = 'scratch operand']
  #allocation3 [shape = 'f32[1,256]{1,0:T(1,128)}', space=vmem, size = 0x400, scoped, tag = 'scratch operand']
  %s0 = inlined_call_operand.hbm [shape: f32[2,4,256], index: 0, kind: input, shape index: {}]
  %s1 = inlined_call_operand.hbm [shape: f32[4,256], index: 1, kind: input, shape index: {}]
  %s2 = inlined_call_operand.vmem [shape: f32[18], index: 2, kind: input, shape index: {}]
  %s3 = inlined_call_operand.hbm [shape: f32[2,1,256], index: 3, kind: output, shape index: {}]
  %s4 = sld [smem:[#allocation0]]
  $region69: #{tpu_custom_call.1} parent=0
    _
  %s6 = ssub.s32 1, %s4
  %s7 = scalar_select 0, %s6, %s4
  $region1: #{tpu_custom_call.1} parent=0
    #allocation4 [shape = 'u8[8192]{0}', space=vmem, size = 0x2000, scoped, tag = 'input window, operand 0']
    #allocation5 [shape = 's32[2]{0}', space=sflag, size = 0x8, scoped, tag = 'scoped memory for tpu_custom_call.1']
    #allocation6 [shape = 's32[2]{0}', space=sflag, size = 0x8, scoped, tag = 'scoped memory for tpu_custom_call.1']
    #allocation7 [shape = 's32[2]{0}', space=sflag, size = 0x8, scoped, tag = 'scoped memory for tpu_custom_call.1']
    #allocation8 [shape = 'u8[4096]{0}', space=vmem, size = 0x1000, scoped, tag = 'input window, operand 1, single buffered']
    #allocation9 [shape = 's32[1]{0}', space=sflag, size = 0x4, scoped, tag = 'scoped memory for tpu_custom_call.1']
    #allocation10 [shape = 'u8[512]{0}', space=smem, size = 0x200, scoped, tag = 'input window, operand 2, single buffered']
    #allocation11 [shape = 'u8[2048]{0}', space=vmem, size = 0x800, scoped, tag = 'output window, operand 0']
    %8 = vsyncpa [#allocation5], 0
    %s9 = scalar_lea.sflag [#allocation5], 1
    %10 = vsyncpa %s9, 0
    %11 = vsyncpa [#allocation9], 0
    %12 = vsyncpa [#allocation7], 0
    %13 = vsyncpa [#allocation6], 0
    %s14 = scalar_lea.sflag [#allocation6], 1
    %15 = vsyncpa %s14, 0
    loop: start=0, step=1, limit=4
    $region2: #{tpu_custom_call.1} parent=1 // loop_pre_header
      _
    $region3: #{tpu_custom_call.1} parent=1 // loop_header
      %s17 = sphi 0, %s21
      %p18 = scmp.ge.s32.totalorder %s17, 4
      %s24 = sphi 0, %s36
      %s25 = sphi 0, %s32
      %s26 = sphi 0, %s24
      %s27 = sphi 0, %s25
      %s28 = sphi 0, %s26
      %s29 = sphi 0, %s27
      %s41 = sphi 0, %s43
      %s44 = sphi 0, %s41
      %s45 = sphi 0, %s44
      %s61 = sphi 0, %s45
      %s65 = sphi 0, %s65
      %s67 = sphi 0, %s65
      %s68 = sphi 0, %s67
      %s82 = sphi 0, %s68
      %s86 = sphi 0, %s86
      %s88 = sphi 0, %s86
      %s89 = sphi 0, %s88
      %s103 = sphi 0, %s89
      %s109 = sphi 0, %s111
      %s112 = sphi 0, %s109
      %s113 = sphi 0, %s112
      %s129 = sphi 0, %s113
    $region4: #{tpu_custom_call.1} parent=1 // loop_header_branch
      %20 = sbr.rel (%p18) target = $region8
    $region5: #{tpu_custom_call.1} parent=1 // loop_body
      %s22 = ssub.s32 %s17, 1
      %s23 = ssub.s32 %s17, 2
      %s30 = sadd.s32 1, %s25
      %p31 = scmp.ge.s32.totalorder %s30, 1
      %s32 = scalar_select %p31, 0, %s30
      %s33 = sadd.s32 1, %s24
      %s34 = scalar_select %p31, %s33, %s24
      %p35 = scmp.ge.s32.totalorder %s34, 2
      %s36 = scalar_select %p35, 0, %s34
      %s37 = ssub.s32 %s24, %s36
      %s38 = ssub.s32 %s25, %s32
      %s39 = sor.u32 %s37, %s38
      %p40 = scmp.eq.s32.totalorder %s39, 0
      %s42 = sadd.s32 %s41, 1
      %s43 = scalar_select %p40, %s41, %s42
      %p46 = pneg %p40
      %p47 = scmp.eq.s32.totalorder %s17, 1
      %p48 = por %p46, %p47
      %p49 = scmp.ne.s32.totalorder %s41, %s44
      %p50 = scmp.eq.s32.totalorder %s17, 0
      %p51 = por %p49, %p50
      %p52 = scmp.ne.s32.totalorder %s41, %s44
      %p53 = scmp.eq.s32.totalorder %s22, 1
      %p54 = por %p52, %p53
      %p55 = scmp.ne.s32.totalorder %s44, %s45
      %p56 = scmp.eq.s32.totalorder %s22, 0
      %p57 = por %p55, %p56
      %p58 = scmp.ne.s32.totalorder %s44, %s45
      %p59 = scmp.eq.s32.totalorder %s23, 1
      %p60 = por %p58, %p59
      %p62 = scmp.ne.s32.totalorder %s45, %s61
      %p63 = scmp.eq.s32.totalorder %s23, 0
      %p64 = por %p62, %p63
      %s66 = sadd.s32 %s65, 1
      %p69 = scmp.eq.s32.totalorder %s17, 1
      %p70 = scmp.ne.s32.totalorder %s65, %s67
      %p71 = scmp.eq.s32.totalorder %s17, 0
      %p72 = por %p70, %p71
      %p73 = scmp.ne.s32.totalorder %s65, %s67
      %p74 = scmp.eq.s32.totalorder %s22, 1
      %p75 = por %p73, %p74
      %p76 = scmp.ne.s32.totalorder %s67, %s68
      %p77 = scmp.eq.s32.totalorder %s22, 0
      %p78 = por %p76, %p77
      %p79 = scmp.ne.s32.totalorder %s67, %s68
      %p80 = scmp.eq.s32.totalorder %s23, 1
      %p81 = por %p79, %p80
      %p83 = scmp.ne.s32.totalorder %s68, %s82
      %p84 = scmp.eq.s32.totalorder %s23, 0
      %p85 = por %p83, %p84
      %s87 = sadd.s32 %s86, 1
      %p90 = scmp.eq.s32.totalorder %s17, 1
      %p91 = scmp.ne.s32.totalorder %s86, %s88
      %p92 = scmp.eq.s32.totalorder %s17, 0
      %p93 = por %p91, %p92
      %p94 = scmp.ne.s32.totalorder %s86, %s88
      %p95 = scmp.eq.s32.totalorder %s22, 1
      %p96 = por %p94, %p95
      %p97 = scmp.ne.s32.totalorder %s88, %s89
      %p98 = scmp.eq.s32.totalorder %s22, 0
      %p99 = por %p97, %p98
      %p100 = scmp.ne.s32.totalorder %s88, %s89
      %p101 = scmp.eq.s32.totalorder %s23, 1
      %p102 = por %p100, %p101
      %p104 = scmp.ne.s32.totalorder %s89, %s103
      %p105 = scmp.eq.s32.totalorder %s23, 0
      %p106 = por %p104, %p105
      %s107 = ssub.s32 %s24, %s36
      %p108 = scmp.eq.s32.totalorder %s107, 0
      %s110 = sadd.s32 %s109, 1
      %s111 = scalar_select %p108, %s109, %s110
      %p114 = pneg %p108
      %p115 = scmp.eq.s32.totalorder %s17, 1
      %p116 = por %p114, %p115
      %p117 = scmp.ne.s32.totalorder %s109, %s112
      %p118 = scmp.eq.s32.totalorder %s17, 0
      %p119 = por %p117, %p118
      %p120 = scmp.ne.s32.totalorder %s109, %s112
      %p121 = scmp.eq.s32.totalorder %s22, 1
      %p122 = por %p120, %p121
      %p123 = scmp.ne.s32.totalorder %s112, %s113
      %p124 = scmp.eq.s32.totalorder %s22, 0
      %p125 = por %p123, %p124
      %p126 = scmp.ne.s32.totalorder %s112, %s113
      %p127 = scmp.eq.s32.totalorder %s23, 1
      %p128 = por %p126, %p127
      %p130 = scmp.ne.s32.totalorder %s113, %s129
      %p131 = scmp.eq.s32.totalorder %s23, 0
      %p132 = por %p130, %p131
      %p133 = scmp.le.s32.totalorder 1, %s17
      %p134 = scmp.lt.s32.totalorder %s17, 3
      %p135 = pnand %p133, %p134
      %p136 = pneg %p135
      // Predicated region
      $region9: #{tpu_custom_call.1} parent=5 // pred_check
        _
      $region10: #{tpu_custom_call.1} parent=5 // pred_check_branch
        %138 = sbr.rel (%p135) target = $region12
      $region11: #{tpu_custom_call.1} parent=5 // pred_region
        %s139 = ssub.s32 %s17, 1
        // Predicated region
        $region13: #{tpu_custom_call.1} parent=11 // pred_check
          %p140 = pneg %p78
        $region14: #{tpu_custom_call.1} parent=11 // pred_check_branch
          %142 = sbr.rel (%p140) target = $region16
        $region15: #{tpu_custom_call.1} parent=11 // pred_region
          %s144 = ssub.s32 128, 128
          %145 = vsyncadd [#allocation9], %s144
          %s147 = sshll.u32 [#allocation8], 4
          %s148 = int_to_ptr.vmem [resolvable:$true] %s147
          %150 = dma.hbm_to_vmem [thread:$0]  %s1, 128, %s148, [#allocation9]
        $region16: #{tpu_custom_call.1} parent=11 // pred_fallthru
          _
        // Predicated region
        $region17: #{tpu_custom_call.1} parent=11 // pred_check
          %p151 = pneg %p99
        $region18: #{tpu_custom_call.1} parent=11 // pred_check_branch
          %153 = sbr.rel (%p151) target = $region20
        $region19: #{tpu_custom_call.1} parent=11 // pred_region
          %s155 = ssub.s32 16, 16
          %156 = vsyncadd [#allocation7], %s155
          %s158 = sshll.u32 %s2, 4
          %s159 = int_to_ptr.vmem [resolvable:$true] %s158
          %161 = dma.vmem_to_smem %s159, 16, [#allocation10], [#allocation7]
        $region20: #{tpu_custom_call.1} parent=11 // pred_fallthru
          _
      $region12: #{tpu_custom_call.1} parent=5 // pred_fallthru
        _
      %p162 = scmp.lt.s32.totalorder %s17, 2
      // Predicated region
      $region21: #{tpu_custom_call.1} parent=5 // pred_check
        %p163 = pneg %p162
      $region22: #{tpu_custom_call.1} parent=5 // pred_check_branch
        %165 = sbr.rel (%p163) target = $region24
      $region23: #{tpu_custom_call.1} parent=5 // pred_region
        // Predicated region
        $region25: #{tpu_custom_call.1} parent=23 // pred_check
          %p166 = pneg %p51
        $region26: #{tpu_custom_call.1} parent=23 // pred_check_branch
          %168 = sbr.rel (%p166) target = $region28
        $region27: #{tpu_custom_call.1} parent=23 // pred_region
          %s169 = sand.u32 %s41, 1
          %s170 = scalar_lea.sflag [#allocation5], %s169
          %s171 = sand.u32 %s41, 1
          %s172 = smul.addr %s171, 8
          %s173 = scalar_lea.vmem [#allocation4], %s172
          %s175 = ssub.s32 128, 128
          %176 = vsyncadd %s170, %s175
          %s177 = smul.addr %s25, 2
          %s178 = smul.addr %s24, 2
          %s179 = sadd.s32 %s177, %s178
          %s180 = smul.addr %s179, 64
          %s181 = scalar_lea.hbm %s0, %s180
          %s183 = sshll.u32 %s173, 4
          %s184 = int_to_ptr.vmem [resolvable:$true] %s183
          %186 = dma.hbm_to_vmem [thread:$0]  %s181, 128, %s184, %s170
        $region28: #{tpu_custom_call.1} parent=23 // pred_fallthru
          _
      $region24: #{tpu_custom_call.1} parent=5 // pred_fallthru
        _
      %p187 = scmp.le.s32.totalorder 1, %s17
      %p188 = scmp.lt.s32.totalorder %s17, 3
      %p189 = pnand %p187, %p188
      %p190 = pneg %p189
      // Predicated region
      $region29: #{tpu_custom_call.1} parent=5 // pred_check
        _
      $region30: #{tpu_custom_call.1} parent=5 // pred_check_branch
        %192 = sbr.rel (%p189) target = $region32
      $region31: #{tpu_custom_call.1} parent=5 // pred_region
        %s193 = ssub.s32 %s17, 1
        %s194 = sand.u32 %s44, 1
        %s195 = scalar_lea.sflag [#allocation5], %s194
        %s196 = sand.u32 %s44, 1
        %s197 = smul.addr %s196, 8
        %s198 = scalar_lea.vmem [#allocation4], %s197
        // Predicated region
        $region33: #{tpu_custom_call.1} parent=31 // pred_check
          %p199 = pneg %p57
        $region34: #{tpu_custom_call.1} parent=31 // pred_check_branch
          %201 = sbr.rel (%p199) target = $region36
        $region35: #{tpu_custom_call.1} parent=31 // pred_region
          %202 = dma.done %s195, 128
        $region36: #{tpu_custom_call.1} parent=31 // pred_fallthru
          _
        // Predicated region
        $region37: #{tpu_custom_call.1} parent=31 // pred_check
          %p203 = pneg %p78
        $region38: #{tpu_custom_call.1} parent=31 // pred_check_branch
          %205 = sbr.rel (%p203) target = $region40
        $region39: #{tpu_custom_call.1} parent=31 // pred_region
          %206 = dma.done [#allocation9], 128
        $region40: #{tpu_custom_call.1} parent=31 // pred_fallthru
          _
        // Predicated region
        $region41: #{tpu_custom_call.1} parent=31 // pred_check
          %p207 = pneg %p99
        $region42: #{tpu_custom_call.1} parent=31 // pred_check_branch
          %209 = sbr.rel (%p207) target = $region44
        $region43: #{tpu_custom_call.1} parent=31 // pred_region
          %210 = dma.done [#allocation7], 16
        $region44: #{tpu_custom_call.1} parent=31 // pred_fallthru
          _
        %211 = sfence
        %s212 = sand.u32 %s44, 1
        %s213 = scalar_lea.sflag [#allocation5], %s212
        %s214 = sand.u32 %s44, 1
        %s215 = smul.addr %s214, 8
        %s216 = scalar_lea.vmem [#allocation4], %s215
        %p217 = pneg %p57
        %p218 = pneg %p54
        %p219 = pneg %p78
        %p220 = pneg %p75
        %p221 = pneg %p99
        %p222 = pneg %p96
        %p223 = pneg %p125
        %p224 = pneg %p122
        %s225 = sand.u32 %s112, 1
        %s226 = scalar_lea.sflag [#allocation6], %s225
        %s227 = sand.u32 %s112, 1
        %s228 = smul.addr %s227, 2
        %s229 = scalar_lea.vmem [#allocation11], %s228
        %v230 = vld [vmem:[%s198] sm:$0xff]
        %v232 = vcombine.high %v230, %v230
        %vm234 = vcmask 1043456
        %v235 = vsel %vm234, %v230, 0.0
        %v236 = vrot.slane %v235, 4
        %v237 = vadd.f32 %v235, %v236
        %v238 = vrot.slane %v237, 2
        %v239 = vadd.f32 %v237, %v238
        %v240 = vrot.slane %v239, 1
        %v241 = vadd.f32 %v239, %v240
        %v242 = vsel %vm234, %v232, 0.0
        %v243 = vrot.slane %v242, 4
        %v244 = vadd.f32 %v242, %v243
        %v245 = vrot.slane %v244, 2
        %v246 = vadd.f32 %v244, %v245
        %v247 = vrot.slane %v246, 1
        %v248 = vadd.f32 %v246, %v247
        %v249 = vsel %vm234, %v230, -inf
        %v250 = vrot.slane %v249, 4
        %v251 = vmax.f32 %v249, %v250
        %v252 = vrot.slane %v251, 2
        %v253 = vmax.f32 %v251, %v252
        %v254 = vrot.slane %v253, 1
        %v255 = vmax.f32 %v253, %v254
        %v256 = vsel %vm234, %v232, -inf
        %v257 = vrot.slane %v256, 4
        %v258 = vmax.f32 %v256, %v257
        %v259 = vrot.slane %v258, 2
        %v260 = vmax.f32 %v258, %v259
        %v261 = vrot.slane %v260, 1
        %v262 = vmax.f32 %v260, %v261
        %p263 = scmp.eq.s32.totalorder %s27, 0
        // Predicated region
        $region45: #{tpu_custom_call.1} parent=31 // pred_check
          %p264 = pneg %p263
        $region46: #{tpu_custom_call.1} parent=31 // pred_check_branch
          %266 = sbr.rel (%p264) target = $region48
        $region47: #{tpu_custom_call.1} parent=31 // pred_region
          %v269 = vcombine.low %v241, %v248
          %v271 = vunpack.c.l.s4 1966171168
          %v272 = vunpack.c.0.s8 %v271
          %v273 = vlaneseq
          %v274 = vshrl.u32 %v273, 7
          %v275 = vsub.s32 %v272, %v274
          %v276 = vrot.slane %v269, %v275
          %v278 = vunpack.c.l.s4 1966171168
          %v279 = vunpack.c.0.s8 %v278
          %v280 = vlaneseq
          %v281 = vshrl.u32 %v280, 7
          %v282 = vsub.s32 %v279, %v281
          %v283 = vrot.slane %v276, %v282
          %v285 = vlaneseq
          %vm286 = vcmp.ge.s32.totalorder %v285, 0
          %vm287 = vcmp.lt.s32.totalorder %v285, 256
          %vm288 = vmand %vm286, %vm287
          %289 = vst.msk [vmem:[#allocation2] sm:$0x3] %vm288, %v283
          %v292 = vcombine.low %v255, %v262
          %v294 = vunpack.c.l.s4 1966171168
          %v295 = vunpack.c.0.s8 %v294
          %v296 = vlaneseq
          %v297 = vshrl.u32 %v296, 7
          %v298 = vsub.s32 %v295, %v297
          %v299 = vrot.slane %v292, %v298
          %v301 = vunpack.c.l.s4 1966171168
          %v302 = vunpack.c.0.s8 %v301
          %v303 = vlaneseq
          %v304 = vshrl.u32 %v303, 7
          %v305 = vsub.s32 %v302, %v304
          %v306 = vrot.slane %v299, %v305
          %308 = vst.msk [vmem:[#allocation3] sm:$0x3] %vm288, %v306
        $region48: #{tpu_custom_call.1} parent=31 // pred_fallthru
          _
        %p309 = scmp.gt.s32.totalorder %s27, 0
        // Predicated region
        $region49: #{tpu_custom_call.1} parent=31 // pred_check
          %p310 = pneg %p309
        $region50: #{tpu_custom_call.1} parent=31 // pred_check_branch
          %312 = sbr.rel (%p310) target = $region52
        $region51: #{tpu_custom_call.1} parent=31 // pred_region
          %v313 = vld [vmem:[#allocation2] sm:$0x3]
          %v316 = vcombine.low %v241, %v248
          %v318 = vunpack.c.l.s4 1966171168
          %v319 = vunpack.c.0.s8 %v318
          %v320 = vlaneseq
          %v321 = vshrl.u32 %v320, 7
          %v322 = vsub.s32 %v319, %v321
          %v323 = vrot.slane %v316, %v322
          %v325 = vunpack.c.l.s4 1966171168
          %v326 = vunpack.c.0.s8 %v325
          %v327 = vlaneseq
          %v328 = vshrl.u32 %v327, 7
          %v329 = vsub.s32 %v326, %v328
          %v330 = vrot.slane %v323, %v329
          %v332 = vadd.f32 %v313, %v330
          %v333 = vlaneseq
          %vm334 = vcmp.ge.s32.totalorder %v333, 0
          %vm335 = vcmp.lt.s32.totalorder %v333, 256
          %vm336 = vmand %vm334, %vm335
          %337 = vst.msk [vmem:[#allocation2] sm:$0x3] %vm336, %v332
          %v338 = vld [vmem:[#allocation3] sm:$0x3]
          %v341 = vcombine.low %v255, %v262
          %v343 = vunpack.c.l.s4 1966171168
          %v344 = vunpack.c.0.s8 %v343
          %v345 = vlaneseq
          %v346 = vshrl.u32 %v345, 7
          %v347 = vsub.s32 %v344, %v346
          %v348 = vrot.slane %v341, %v347
          %v350 = vunpack.c.l.s4 1966171168
          %v351 = vunpack.c.0.s8 %v350
          %v352 = vlaneseq
          %v353 = vshrl.u32 %v352, 7
          %v354 = vsub.s32 %v351, %v353
          %v355 = vrot.slane %v348, %v354
          %v357 = vmax.f32 %v338, %v355
          %358 = vst.msk [vmem:[#allocation3] sm:$0x3] %vm336, %v357
        $region52: #{tpu_custom_call.1} parent=31 // pred_fallthru
          _
        // Predicated region
        $region53: #{tpu_custom_call.1} parent=31 // pred_check
          %p359 = pneg %p263
        $region54: #{tpu_custom_call.1} parent=31 // pred_check_branch
          %361 = sbr.rel (%p359) target = $region56
        $region55: #{tpu_custom_call.1} parent=31 // pred_region
          %v362 = vld [vmem:[#allocation2] sm:$0x3]
          %v363 = vmul.f32 %v362, 0.25
          %v364 = vld [vmem:[#allocation3] sm:$0x3]
          %v365 = vld [vmem:[#allocation8] ss:$4 sm:$0x3]
          %s366 = scalar_lea.vmem [#allocation8], 1
          %v367 = vld [vmem:[%s366] ss:$4 sm:$0x3]
          %s368 = scalar_lea.vmem [#allocation8], 2
          %v369 = vld [vmem:[%s368] ss:$4 sm:$0x3]
          %s370 = scalar_lea.vmem [#allocation8], 3
          %v371 = vld [vmem:[%s370] ss:$4 sm:$0x3]
          %s372 = sld [smem:[#allocation10]]
          %s373 = sld [smem:[#allocation10 + $0x1]]
          %s374 = sld [smem:[#allocation10 + $0x2]]
          %s375 = sld [smem:[#allocation10 + $0x3]]
          %s376 = sld [smem:[#allocation10 + $0x4]]
          %s377 = sld [smem:[#allocation10 + $0x5]]
          %s378 = sld [smem:[#allocation10 + $0x6]]
          %s379 = sld [smem:[#allocation10 + $0x7]]
          %s380 = sld [smem:[#allocation10 + $0x8]]
          %s381 = sld [smem:[#allocation10 + $0x9]]
          %s382 = sld [smem:[#allocation10 + $0xa]]
          %s383 = sld [smem:[#allocation10 + $0xb]]
          %s384 = sld [smem:[#allocation10 + $0xc]]
          %s385 = sld [smem:[#allocation10 + $0xd]]
          %s386 = sld [smem:[#allocation10 + $0xe]]
          %s387 = sld [smem:[#allocation10 + $0xf]]
          %s388 = sld [smem:[#allocation10 + $0x10]]
          %s389 = sld [smem:[#allocation10 + $0x11]]
          %v391 = vlaneseq
          %v392 = vshrl.u32 %v391, 7
          %v393 = vsub.s32 0, %v392
          %v394 = vrot.slane %v363, %v393
          %v395 = vlaneseq
          %v396 = vshrl.u32 %v395, 7
          %v397 = vsub.s32 1, %v396
          %v398 = vrot.slane %v363, %v397
          %401 = vrot.lane.b32.xlu0 %v394, 1
          %v402 = vpop.permute.xlu0 %401
          %403 = vrot.lane.b32.xlu0 %v398, 1
          %v404 = vpop.permute.xlu0 %403
          %v405 = vlaneseq
          %v406 = vand.u32 %v405, 127
          %vm407 = vcmp.lt.s32.totalorder %v406, 1
          %v408 = vsel %vm407, %v402, %v404
          %v409 = vsel %vm407, %v404, %v402
          %v411 = vlaneseq
          %v412 = vshrl.u32 %v411, 7
          %v413 = vsub.s32 0, %v412
          %v414 = vrot.slane %v365, %v413
          %v415 = vlaneseq
          %v416 = vshrl.u32 %v415, 7
          %v417 = vsub.s32 1, %v416
          %v418 = vrot.slane %v365, %v417
          %v421 = vmul.f32 %v409, %v414
          %v422 = vmul.f32 %v408, %v418
          %423 = vrot.lane.b32.xlu0 %v394, 127
          %v424 = vpop.permute.xlu0 %423
          %425 = vrot.lane.b32.xlu0 %v398, 127
          %v426 = vpop.permute.xlu0 %425
          %vm427 = vcmp.lt.s32.totalorder %v406, 127
          %v428 = vsel %vm427, %v424, %v426
          %v429 = vsel %vm427, %v426, %v424
          %v431 = vlaneseq
          %v432 = vshrl.u32 %v431, 7
          %v433 = vsub.s32 0, %v432
          %v434 = vrot.slane %v367, %v433
          %v435 = vlaneseq
          %v436 = vshrl.u32 %v435, 7
          %v437 = vsub.s32 1, %v436
          %v438 = vrot.slane %v367, %v437
          %v441 = vmul.f32 %v428, %v434
          %v442 = vmul.f32 %v429, %v438
          %v444 = vlaneseq
          %v445 = vshrl.u32 %v444, 7
          %v446 = vsub.s32 0, %v445
          %v447 = vrot.slane %v364, %v446
          %v448 = vlaneseq
          %v449 = vshrl.u32 %v448, 7
          %v450 = vsub.s32 1, %v449
          %v451 = vrot.slane %v364, %v450
          %454 = vrot.lane.b32.xlu0 %v447, 1
          %v455 = vpop.permute.xlu0 %454
          %456 = vrot.lane.b32.xlu0 %v451, 1
          %v457 = vpop.permute.xlu0 %456
          %v458 = vsel %vm407, %v455, %v457
          %v459 = vsel %vm407, %v457, %v455
          %v460 = vmul.f32 %v459, %v414
          %v461 = vmul.f32 %v458, %v418
          %462 = vrot.lane.b32.xlu0 %v447, 127
          %v463 = vpop.permute.xlu0 %462
          %464 = vrot.lane.b32.xlu0 %v451, 127
          %v465 = vpop.permute.xlu0 %464
          %v466 = vsel %vm427, %v463, %v465
          %v467 = vsel %vm427, %v465, %v463
          %v468 = vmul.f32 %v466, %v434
          %v469 = vmul.f32 %v467, %v438
          %v470 = vstv %s372
          %v471 = vmul.f32 %v470, %v421
          %v472 = vmul.f32 %v470, %v422
          %v473 = vadd.f32 %v471, 0.0
          %v474 = vadd.f32 %v472, 0.0
          %v475 = vstv %s373
          %v476 = vmul.f32 %v475, %v363
          %v478 = vlaneseq
          %v479 = vshrl.u32 %v478, 7
          %v480 = vsub.s32 0, %v479
          %v481 = vrot.slane %v476, %v480
          %v482 = vlaneseq
          %v483 = vshrl.u32 %v482, 7
          %v484 = vsub.s32 1, %v483
          %v485 = vrot.slane %v476, %v484
          %v488 = vadd.f32 %v473, %v481
          %v489 = vadd.f32 %v474, %v485
          %v490 = vstv %s374
          %v491 = vmul.f32 %v490, %v441
          %v492 = vmul.f32 %v490, %v442
          %v493 = vadd.f32 %v488, %v491
          %v494 = vadd.f32 %v489, %v492
          %v495 = vstv %s381
          %v496 = vmul.f32 %v495, %v460
          %v497 = vmul.f32 %v495, %v461
          %v498 = vadd.f32 %v493, %v496
          %v499 = vadd.f32 %v494, %v497
          %v500 = vstv %s382
          %v501 = vmul.f32 %v500, %v364
          %v503 = vlaneseq
          %v504 = vshrl.u32 %v503, 7
          %v505 = vsub.s32 0, %v504
          %v506 = vrot.slane %v501, %v505
          %v507 = vlaneseq
          %v508 = vshrl.u32 %v507, 7
          %v509 = vsub.s32 1, %v508
          %v510 = vrot.slane %v501, %v509
          %v513 = vadd.f32 %v498, %v506
          %v514 = vadd.f32 %v499, %v510
          %v515 = vstv %s383
          %v516 = vmul.f32 %v515, %v468
          %v517 = vmul.f32 %v515, %v469
          %v518 = vadd.f32 %v513, %v516
          %v519 = vadd.f32 %v514, %v517
          %520 = vrot.lane.b32.xlu0 %v518, 16
          %v521 = vpop.permute.xlu0 %520
          %522 = vrot.lane.b32.xlu0 %v519, 16
          %v523 = vpop.permute.xlu0 %522
          %vm524 = vcmp.lt.s32.totalorder %v406, 16
          %v525 = vsel %vm524, %v521, %v523
          %v526 = vsel %vm524, %v523, %v521
          %v528 = vlaneseq
          %v529 = vshrl.u32 %v528, 7
          %v530 = vsub.s32 0, %v529
          %v531 = vrot.slane %v369, %v530
          %v532 = vlaneseq
          %v533 = vshrl.u32 %v532, 7
          %v534 = vsub.s32 1, %v533
          %v535 = vrot.slane %v369, %v534
          %v538 = vmul.f32 %v526, %v531
          %v539 = vmul.f32 %v525, %v535
          %v540 = vadd.f32 %v538, 0.0
          %v541 = vadd.f32 %v539, 0.0
          %v542 = vstv %s375
          %v543 = vmul.f32 %v542, %v421
          %v544 = vmul.f32 %v542, %v422
          %v545 = vadd.f32 %v543, 0.0
          %v546 = vadd.f32 %v544, 0.0
          %v547 = vstv %s376
          %v548 = vmul.f32 %v547, %v363
          %v550 = vlaneseq
          %v551 = vshrl.u32 %v550, 7
          %v552 = vsub.s32 0, %v551
          %v553 = vrot.slane %v548, %v552
          %v554 = vlaneseq
          %v555 = vshrl.u32 %v554, 7
          %v556 = vsub.s32 1, %v555
          %v557 = vrot.slane %v548, %v556
          %v560 = vadd.f32 %v545, %v553
          %v561 = vadd.f32 %v546, %v557
          %v562 = vstv %s377
          %v563 = vmul.f32 %v562, %v441
          %v564 = vmul.f32 %v562, %v442
          %v565 = vadd.f32 %v560, %v563
          %v566 = vadd.f32 %v561, %v564
          %v567 = vstv %s384
          %v568 = vmul.f32 %v567, %v460
          %v569 = vmul.f32 %v567, %v461
          %v570 = vadd.f32 %v565, %v568
          %v571 = vadd.f32 %v566, %v569
          %v572 = vstv %s385
          %v573 = vmul.f32 %v572, %v364
          %v575 = vlaneseq
          %v576 = vshrl.u32 %v575, 7
          %v577 = vsub.s32 0, %v576
          %v578 = vrot.slane %v573, %v577
          %v579 = vlaneseq
          %v580 = vshrl.u32 %v579, 7
          %v581 = vsub.s32 1, %v580
          %v582 = vrot.slane %v573, %v581
          %v585 = vadd.f32 %v570, %v578
          %v586 = vadd.f32 %v571, %v582
          %v587 = vstv %s386
          %v588 = vmul.f32 %v587, %v468
          %v589 = vmul.f32 %v587, %v469
          %v590 = vadd.f32 %v585, %v588
          %v591 = vadd.f32 %v586, %v589
          %v592 = vadd.f32 %v540, %v590
          %v593 = vadd.f32 %v541, %v591
          %v594 = vstv %s378
          %v595 = vmul.f32 %v594, %v421
          %v596 = vmul.f32 %v594, %v422
          %v597 = vadd.f32 %v595, 0.0
          %v598 = vadd.f32 %v596, 0.0
          %v599 = vstv %s379
          %v600 = vmul.f32 %v599, %v363
          %v602 = vlaneseq
          %v603 = vshrl.u32 %v602, 7
          %v604 = vsub.s32 0, %v603
          %v605 = vrot.slane %v600, %v604
          %v606 = vlaneseq
          %v607 = vshrl.u32 %v606, 7
          %v608 = vsub.s32 1, %v607
          %v609 = vrot.slane %v600, %v608
          %v612 = vadd.f32 %v597, %v605
          %v613 = vadd.f32 %v598, %v609
          %v614 = vstv %s380
          %v615 = vmul.f32 %v614, %v441
          %v616 = vmul.f32 %v614, %v442
          %v617 = vadd.f32 %v612, %v615
          %v618 = vadd.f32 %v613, %v616
          %v619 = vstv %s387
          %v620 = vmul.f32 %v619, %v460
          %v621 = vmul.f32 %v619, %v461
          %v622 = vadd.f32 %v617, %v620
          %v623 = vadd.f32 %v618, %v621
          %v624 = vstv %s388
          %v625 = vmul.f32 %v624, %v364
          %v627 = vlaneseq
          %v628 = vshrl.u32 %v627, 7
          %v629 = vsub.s32 0, %v628
          %v630 = vrot.slane %v625, %v629
          %v631 = vlaneseq
          %v632 = vshrl.u32 %v631, 7
          %v633 = vsub.s32 1, %v632
          %v634 = vrot.slane %v625, %v633
          %v637 = vadd.f32 %v622, %v630
          %v638 = vadd.f32 %v623, %v634
          %v639 = vstv %s389
          %v640 = vmul.f32 %v639, %v468
          %v641 = vmul.f32 %v639, %v469
          %v642 = vadd.f32 %v637, %v640
          %v643 = vadd.f32 %v638, %v641
          %644 = vrot.lane.b32.xlu0 %v642, 112
          %v645 = vpop.permute.xlu0 %644
          %646 = vrot.lane.b32.xlu0 %v643, 112
          %v647 = vpop.permute.xlu0 %646
          %vm648 = vcmp.lt.s32.totalorder %v406, 112
          %v649 = vsel %vm648, %v645, %v647
          %v650 = vsel %vm648, %v647, %v645
          %v652 = vlaneseq
          %v653 = vshrl.u32 %v652, 7
          %v654 = vsub.s32 0, %v653
          %v655 = vrot.slane %v371, %v654
          %v656 = vlaneseq
          %v657 = vshrl.u32 %v656, 7
          %v658 = vsub.s32 1, %v657
          %v659 = vrot.slane %v371, %v658
          %v662 = vmul.f32 %v649, %v655
          %v663 = vmul.f32 %v650, %v659
          %v664 = vadd.f32 %v592, %v662
          %v665 = vadd.f32 %v593, %v663
          %v666 = vxor.u32 %v664, 2147483648
          %v667 = vxor.u32 %v665, 2147483648
          %v668 = vmul.f32 %v666, 1.442695
          %v669 = vpow.pop %v668
          %v670 = vmul.f32 %v667, 1.442695
          %v671 = vpow.pop %v670
          %v672 = vadd.f32 %v669, 1.0
          %v673 = vadd.f32 %v671, 1.0
          %v674 = vrcp.pop %v672
          %v675 = vmul.f32 1.0, %v674
          %v676 = vrcp.pop %v673
          %v677 = vmul.f32 1.0, %v676
          %v678 = vmul.f32 %v664, %v675
          %v679 = vmul.f32 %v665, %v677
          %v682 = vcombine.low %v678, %v679
          %v684 = vunpack.c.l.s4 1966171168
          %v685 = vunpack.c.0.s8 %v684
          %v686 = vlaneseq
          %v687 = vshrl.u32 %v686, 7
          %v688 = vsub.s32 %v685, %v687
          %v689 = vrot.slane %v682, %v688
          %v691 = vunpack.c.l.s4 1966171168
          %v692 = vunpack.c.0.s8 %v691
          %v693 = vlaneseq
          %v694 = vshrl.u32 %v693, 7
          %v695 = vsub.s32 %v692, %v694
          %v696 = vrot.slane %v689, %v695
          %v698 = vlaneseq
          %vm699 = vcmp.ge.s32.totalorder %v698, 0
          %vm700 = vcmp.lt.s32.totalorder %v698, 256
          %vm701 = vmand %vm699, %vm700
          %702 = vst.msk [vmem:[%s229] sm:$0x3] %vm701, %v696
        $region56: #{tpu_custom_call.1} parent=31 // pred_fallthru
          _
        %s703 = sand.u32 %s112, 1
        %s704 = scalar_lea.sflag [#allocation6], %s703
        %s705 = sand.u32 %s112, 1
        %s706 = smul.addr %s705, 2
        %s707 = scalar_lea.vmem [#allocation11], %s706
        // Predicated region
        $region57: #{tpu_custom_call.1} parent=31 // pred_check
          %p708 = pneg %p122
        $region58: #{tpu_custom_call.1} parent=31 // pred_check_branch
          %710 = sbr.rel (%p708) target = $region60
        $region59: #{tpu_custom_call.1} parent=31 // pred_region
          %s712 = ssub.s32 32, 32
          %713 = vsyncadd %s704, %s712
          %s714 = smul.addr %s26, 2
          %s715 = smul.addr %s714, 16
          %s716 = scalar_lea.hbm %s3, %s715
          %s718 = sshll.u32 %s707, 4
          %s719 = int_to_ptr.vmem [resolvable:$true] %s718
          %721 = dma.vmem_to_hbm [thread:$0]  %s719, 32, %s716, %s704
        $region60: #{tpu_custom_call.1} parent=31 // pred_fallthru
          _
      $region32: #{tpu_custom_call.1} parent=5 // pred_fallthru
        _
      %p722 = scmp.le.s32.totalorder 2, %s17
      // Predicated region
      $region61: #{tpu_custom_call.1} parent=5 // pred_check
        %p723 = pneg %p722
      $region62: #{tpu_custom_call.1} parent=5 // pred_check_branch
        %725 = sbr.rel (%p723) target = $region64
      $region63: #{tpu_custom_call.1} parent=5 // pred_region
        %s726 = ssub.s32 %s17, 2
        // Predicated region
        $region65: #{tpu_custom_call.1} parent=63 // pred_check
          %p727 = pneg %p128
        $region66: #{tpu_custom_call.1} parent=63 // pred_check_branch
          %729 = sbr.rel (%p727) target = $region68
        $region67: #{tpu_custom_call.1} parent=63 // pred_region
          %s730 = sand.u32 %s113, 1
          %s731 = scalar_lea.sflag [#allocation6], %s730
          %s732 = sand.u32 %s113, 1
          %s733 = smul.addr %s732, 2
          %s734 = scalar_lea.vmem [#allocation11], %s733
          %735 = dma.done %s731, 32
        $region68: #{tpu_custom_call.1} parent=63 // pred_fallthru
          _
      $region64: #{tpu_custom_call.1} parent=5 // pred_fallthru
        _
    $region6: #{tpu_custom_call.1} parent=1 // loop_footer
      %s21 = sadd.s32 1, %s17
    $region7: #{tpu_custom_call.1} parent=1 // loop_footer_branch
      %16 = sbr.rel target = $region3
    $region8: #{tpu_custom_call.1} parent=1 // loop_exit
      _
    %736 = vsyncpa [#allocation5], 1
    %s737 = scalar_lea.sflag [#allocation5], 1
    %738 = vsyncpa %s737, 1
    %739 = vsyncpa [#allocation9], 1
    %740 = vsyncpa [#allocation6], 1
    %s741 = scalar_lea.sflag [#allocation6], 1
    %742 = vsyncpa %s741, 1
    %743 = vsyncpa [#allocation7], 1
    %s744 = scalar_lea.sflag [#allocation7], 1
    %745 = vsyncpa %s744, 1

</llo_original>
